<compile_context>
chip_gen: v5e
topology: v5e:2x2
jax: 0.10.0
libtpu: 0.0.40
codegen_flags: <defaults>
</compile_context>

<pallas_src>
import functools

import jax
import jax.numpy as jnp
from jax import lax
from jax.experimental import pallas as pl
from jax.experimental.pallas import tpu as pltpu


def _round_up(x, m):
    return (x + m - 1) // m * m


def logreg_kernel(x_ref, w_ref, b_ref, o_ref, *, tf, f_total, single_k, mask_last_k):
    k = pl.program_id(1)

    @pl.when(k == 0)
    def _init():
        o_ref[...] = jnp.zeros_like(o_ref)

    x = x_ref[...]
    if mask_last_k:
        # Last feature tile may read past F (x is not padded in the wrapper); zero
        # those columns so garbage (possibly NaN) never reaches the accumulator.
        col = lax.broadcasted_iota(jnp.int32, x.shape, 1) + k * tf
        x = jnp.where(col < f_total, x, jnp.zeros_like(x))

    if single_k:
        w_blk = w_ref[...]                                # (1, F) resident weight
    else:
        start = pl.multiple_of(k * tf, 128)               # tf % 128 == 0 in this branch
        w_blk = w_ref[:, pl.ds(start, tf)]                # (1, tf) slice, no extra DMA

    # (tb, tf) . (1, tf) contracted over features -> (tb, 1).  x stays in standard
    # MXU-LHS orientation (no per-step transpose of the streamed tile).
    o_ref[...] += lax.dot_general(
        x, w_blk,
        dimension_numbers=(((1,), (1,)), ((), ())),
        preferred_element_type=jnp.float32,
    )

    @pl.when(k == pl.num_programs(1) - 1)
    def _finalize():
        z = o_ref[...] + b_ref[0, 0]                      # scalar bias from SMEM
        o_ref[...] = 1.0 / (1.0 + jnp.exp(-z))            # exact sigmoid


def logistic_regression(x, weight, bias, *, tf_max=2048,
                        x_block_budget_bytes=8 * 1024 * 1024):
    """x: (B, F), weight: (1, F), bias: (1,) -> (B, 1) float32."""
    B, F = x.shape
    assert weight.shape == (1, F)
    itemsize = jnp.dtype(x.dtype).itemsize

    # Feature (reduction) tiling: single block if it fits, else 128-aligned chunks.
    if F <= tf_max:
        tf, f_pad = F, F
    else:
        tf = tf_max                                       # multiple of 128
        f_pad = _round_up(F, tf)
    num_k = f_pad // tf
    mask_last_k = f_pad != F

    # Batch tile sized by bytes: target ~8 MiB per x block (amortizes the ~0.35 us
    # per-grid-step overhead on every generation, double-buffered stays well inside
    # v7x's 64 MiB VMEM), rounded to the 8-row sublane granule, capped at the batch.
    tb = max(8, (x_block_budget_bytes // (itemsize * tf)) // 8 * 8)
    tb = min(tb, _round_up(B, 8))
    grid_b = pl.cdiv(B, tb)              # ragged last batch tile handled by Pallas

    # Weight: pad (tiny, 4*F bytes) along features only, so the in-kernel pl.ds slice
    # of the resident copy never reads out of bounds; padded columns are exact zeros.
    w_p = weight if f_pad == F else jnp.pad(weight, ((0, 0), (0, f_pad - F)))
    w_p = w_p.astype(x.dtype)
    b_smem = bias.reshape(1, 1).astype(jnp.float32)

    # VMEM footprint: double-buffered x blocks + resident weight + (tb,1) out blocks.
    vmem_needed = (2 * tb * tf * itemsize
                   + 8 * f_pad * itemsize
                   + 2 * tb * 128 * 4
                   + (2 << 20))
    vmem_limit = int(min(max(vmem_needed, 32 << 20), 64 << 20))   # v7x-safe cap

    kernel = functools.partial(
        logreg_kernel, tf=tf, f_total=F, single_k=(num_k == 1),
        mask_last_k=mask_last_k)

    return pl.pallas_call(
        kernel,
        out_shape=jax.ShapeDtypeStruct((B, 1), jnp.float32),
        grid_spec=pltpu.PrefetchScalarGridSpec(
            num_scalar_prefetch=0,
            grid=(grid_b, num_k),
            in_specs=[
                pl.BlockSpec((tb, tf), lambda i, k: (i, k)),        # x streamed from HBM
                pl.BlockSpec((1, f_pad), lambda i, k: (0, 0)),      # weight resident in VMEM
                pl.BlockSpec(memory_space=pltpu.MemorySpace.SMEM),  # bias scalar in SMEM
            ],
            out_specs=pl.BlockSpec((tb, 1), lambda i, k: (i, 0)),   # out block = accumulator
        ),
        compiler_params=pltpu.CompilerParams(
            dimension_semantics=("parallel", "arbitrary"),
            vmem_limit_bytes=vmem_limit,
        ),
    )(x, w_p, b_smem)


if __name__ == "__main__":
    batch, num_features = 8, 32

    key = jax.random.PRNGKey(0)
    kx, kw, kb = jax.random.split(key, 3)

    # Mirrors nn.Linear(num_features, 1): weight (1, F), bias (1,).
    x = jax.random.normal(kx, (batch, num_features), dtype=jnp.float32)
    bound = 1.0 / (num_features ** 0.5)
    weight = jax.random.uniform(kw, (1, num_features), jnp.float32, -bound, bound)
    bias = jax.random.uniform(kb, (1,), jnp.float32, -bound, bound)

    y = jax.block_until_ready(logistic_regression(x, weight, bias))

    y_ref = jax.nn.sigmoid(x @ weight.T + bias)
    assert y.shape == (batch, 1)
    assert jnp.allclose(y, y_ref, rtol=1e-5, atol=1e-5), "mismatch vs reference"

    print("KERNEL_OK")
</pallas_src>

<mosaic_0001>
module attributes {stable_mosaic.version = 11 : i64} {
  func.func @logreg_kernel(%arg0: i32, %arg1: i32, %arg2: memref<8x32xf32, #tpu.memory_space<vmem>>, %arg3: memref<1x32xf32, #tpu.memory_space<vmem>>, %arg4: memref<1x1xf32, #tpu.memory_space<smem>>, %arg5: memref<8x1xf32, #tpu.memory_space<vmem>>) attributes {dimension_semantics = [#tpu.dimension_semantics<parallel>, #tpu.dimension_semantics<arbitrary>], iteration_bounds = array<i64: 1, 1>, scalar_prefetch = 0 : i64, scratch_operands = 0 : i64, tpu.core_type = #tpu.core_type<tc>, window_params = [{transform_indices = @transform_0, window_bounds = array<i64: 8, 32>}, {pipeline_mode = #tpu.pipeline_mode<synchronous>, transform_indices = @transform_1, window_bounds = array<i64: 1, 32>}, {transform_indices = @transform_2, window_bounds = array<i64: 1, 1>}, {transform_indices = @transform_3, window_bounds = array<i64: 8, 1>}]} {
    %c0_i32 = arith.constant 0 : i32
    %0 = arith.cmpi eq, %arg1, %c0_i32 : i32
    %1 = arith.extui %0 : i1 to i32
    %c0_i32_0 = arith.constant 0 : i32
    %2 = arith.cmpi ne, %1, %c0_i32_0 : i32
    scf.if %2 {
      %cst_10 = arith.constant 0.000000e+00 : f32
      %12 = vector.broadcast %cst_10 : f32 to vector<8x1xf32>
      %c0_11 = arith.constant 0 : index
      %c0_12 = arith.constant 0 : index
      %13 = vector.load %arg5[%c0_11, %c0_12] : memref<8x1xf32, #tpu.memory_space<vmem>>, vector<8x1xf32>
      tpu.vector_store %arg5[%c0_11, %c0_12], %12 {strides = array<i32>} : memref<8x1xf32, #tpu.memory_space<vmem>>, vector<8x1xf32>,
    } else {
    }
    %c0 = arith.constant 0 : index
    %c0_1 = arith.constant 0 : index
    %3 = vector.load %arg2[%c0, %c0_1] : memref<8x32xf32, #tpu.memory_space<vmem>>, vector<8x32xf32>
    %c0_2 = arith.constant 0 : index
    %c0_3 = arith.constant 0 : index
    %4 = vector.load %arg3[%c0_2, %c0_3] : memref<1x32xf32, #tpu.memory_space<vmem>>, vector<1x32xf32>
    %c0_4 = arith.constant 0 : index
    %c0_5 = arith.constant 0 : index
    %5 = vector.load %arg5[%c0_4, %c0_5] : memref<8x1xf32, #tpu.memory_space<vmem>>, vector<8x1xf32>
    %cst = arith.constant dense<0.000000e+00> : vector<8x1xf32>
    %6 = tpu.matmul %3, %4, %cst {dimension_numbers = #tpu.dot_dimension_numbers<[1], [1], [0], [0], [0, 0, 1, 0], [], []>} : vector<8x32xf32>, vector<1x32xf32>, vector<8x1xf32> -> vector<8x1xf32>
    %7 = arith.addf %5, %6 : vector<8x1xf32>
    %c0_6 = arith.constant 0 : index
    %c0_7 = arith.constant 0 : index
    %8 = vector.load %arg5[%c0_6, %c0_7] : memref<8x1xf32, #tpu.memory_space<vmem>>, vector<8x1xf32>
    tpu.vector_store %arg5[%c0_6, %c0_7], %7 {strides = array<i32>} : memref<8x1xf32, #tpu.memory_space<vmem>>, vector<8x1xf32>,
    %c0_i32_8 = arith.constant 0 : i32
    %9 = arith.cmpi eq, %arg1, %c0_i32_8 : i32
    %10 = arith.extui %9 : i1 to i32
    %c0_i32_9 = arith.constant 0 : i32
    %11 = arith.cmpi ne, %10, %c0_i32_9 : i32
    scf.if %11 {
      %c0_10 = arith.constant 0 : index
      %c0_11 = arith.constant 0 : index
      %12 = vector.load %arg5[%c0_10, %c0_11] : memref<8x1xf32, #tpu.memory_space<vmem>>, vector<8x1xf32>
      %c0_12 = arith.constant 0 : index
      %c0_13 = arith.constant 0 : index
      %13 = memref.load %arg4[%c0_12, %c0_13] : memref<1x1xf32, #tpu.memory_space<smem>>
      %14 = vector.broadcast %13 : f32 to vector<8x1xf32>
      %15 = arith.addf %12, %14 : vector<8x1xf32>
      %cst_14 = arith.constant 0.000000e+00 : f32
      %16 = vector.broadcast %cst_14 : f32 to vector<8x1xf32>
      %17 = arith.subf %16, %15 : vector<8x1xf32>
      %18 = math.exp %17 : vector<8x1xf32>
      %cst_15 = arith.constant 1.000000e+00 : f32
      %19 = vector.broadcast %cst_15 : f32 to vector<8x1xf32>
      %20 = arith.addf %19, %18 : vector<8x1xf32>
      %cst_16 = arith.constant 1.000000e+00 : f32
      %21 = vector.broadcast %cst_16 : f32 to vector<8x1xf32>
      %22 = arith.divf %21, %20 : vector<8x1xf32>
      %c0_17 = arith.constant 0 : index
      %c0_18 = arith.constant 0 : index
      %23 = vector.load %arg5[%c0_17, %c0_18] : memref<8x1xf32, #tpu.memory_space<vmem>>, vector<8x1xf32>
      tpu.vector_store %arg5[%c0_17, %c0_18], %22 {strides = array<i32>} : memref<8x1xf32, #tpu.memory_space<vmem>>, vector<8x1xf32>,
    } else {
    }
    return
  }
  func.func @transform_0(%arg0: i32, %arg1: i32) -> (i32, i32) {
    %c0_i32 = arith.constant 0 : i32
    return %arg0, %arg1 : i32, i32
  }
  func.func @transform_1(%arg0: i32, %arg1: i32) -> (i32, i32) {
    %c0_i32 = arith.constant 0 : i32
    %c0_i32_0 = arith.constant 0 : i32
    %c0_i32_1 = arith.constant 0 : i32
    return %c0_i32, %c0_i32_0 : i32, i32
  }
  func.func @transform_2(%arg0: i32, %arg1: i32) -> (i32, i32) {
    %c0_i32 = arith.constant 0 : i32
    %c0_i32_0 = arith.constant 0 : i32
    %c0_i32_1 = arith.constant 0 : i32
    return %c0_i32, %c0_i32_0 : i32, i32
  }
  func.func @transform_3(%arg0: i32, %arg1: i32) -> (i32, i32) {
    %c0_i32 = arith.constant 0 : i32
    %c0_i32_0 = arith.constant 0 : i32
    return %arg0, %c0_i32 : i32, i32
  }
}

</mosaic_0001>

<llo_original>
// kernel: tpu_custom_call.1
$region0: #{tpu_custom_call.1}
  #allocation0 [shape = 'u32[]', space=smem, size = 0x4, offset = 0x4, fixed_abs, tag = 'smem constant byte address 0x4 - core index']
  #allocation1 [shape = 'u32[72,128]{1,0:T(1,128)}', space=vmem, size = 0x9000, scoped, tag = 'internal scratch']
  #allocation2 [shape = 'f32[1,1]{1,0:T(1,128)S(6)}', space=smem, size = 0x200, scoped, tag = 'scoped memory for tpu_custom_call.1']
  %s0 = inlined_call_operand.hbm [shape: f32[8,32], index: 0, kind: input, shape index: {}]
  %s1 = inlined_call_operand.vmem [shape: f32[1,32], index: 1, kind: input, shape index: {}]
  %s2 = inlined_call_operand.<no memory space> [shape: f32[1,1], index: 2, kind: input, shape index: {}]
  %s3 = inlined_call_operand.vmem [shape: f32[8,1], index: 3, kind: output, shape index: {}]
  %s4 = sld [smem:[#allocation0]]
  $region34: #{tpu_custom_call.1} parent=0
    _
  %s6 = ssub.s32 1, %s4
  %s7 = scalar_select 0, %s6, %s4
  %8 = sst [smem:[#allocation2]] %s2
  $region1: #{tpu_custom_call.1} parent=0
    #allocation3 [shape = 'u8[4096]{0}', space=vmem, size = 0x1000, scoped, tag = 'input window, operand 0, single buffered']
    #allocation4 [shape = 's32[1]{0}', space=sflag, size = 0x4, scoped, tag = 'scoped memory for tpu_custom_call.1']
    %9 = vsyncpa [#allocation4], 0
    // Predicated region
    $region2: #{tpu_custom_call.1} parent=1 // pred_check
      _
    $region3: #{tpu_custom_call.1} parent=1 // pred_check_branch
      %11 = sbr.rel (0) target = $region5
    $region4: #{tpu_custom_call.1} parent=1 // pred_region
      %13 = vsyncadd [#allocation4], 0
      %s15 = sshll.u32 %s0, 4
      %s16 = int_to_ptr.hbm [resolvable:$true] %s15
      %s17 = sshll.u32 [#allocation3], 4
      %s18 = int_to_ptr.vmem [resolvable:$true] %s17
      %20 = dma.hbm_to_vmem [thread:$0]  %s16, 128, %s18, [#allocation4]
    $region5: #{tpu_custom_call.1} parent=1 // pred_fallthru
      _
    // Predicated region
    $region6: #{tpu_custom_call.1} parent=1 // pred_check
      _
    $region7: #{tpu_custom_call.1} parent=1 // pred_check_branch
      %22 = sbr.rel (0) target = $region9
    $region8: #{tpu_custom_call.1} parent=1 // pred_region
      _
    $region9: #{tpu_custom_call.1} parent=1 // pred_fallthru
      _
    // Predicated region
    $region10: #{tpu_custom_call.1} parent=1 // pred_check
      _
    $region11: #{tpu_custom_call.1} parent=1 // pred_check_branch
      %24 = sbr.rel (0) target = $region13
    $region12: #{tpu_custom_call.1} parent=1 // pred_region
      _
    $region13: #{tpu_custom_call.1} parent=1 // pred_fallthru
      _
    // Predicated region
    $region14: #{tpu_custom_call.1} parent=1 // pred_check
      _
    $region15: #{tpu_custom_call.1} parent=1 // pred_check_branch
      %26 = sbr.rel (0) target = $region17
    $region16: #{tpu_custom_call.1} parent=1 // pred_region
      %28 = dma.done [#allocation4], 128
    $region17: #{tpu_custom_call.1} parent=1 // pred_fallthru
      _
    %p29 = scmp.eq.s32.totalorder 0, 0
    // Predicated region
    $region18: #{tpu_custom_call.1} parent=1 // pred_check
      %p30 = pneg %p29
    $region19: #{tpu_custom_call.1} parent=1 // pred_check_branch
      %32 = sbr.rel (%p30) target = $region21
    $region20: #{tpu_custom_call.1} parent=1 // pred_region
      %vm33 = vcmask 7168
      %34 = vst.msk [vmem:[%s3] sm:$0xff] %vm33, 0.0
    $region21: #{tpu_custom_call.1} parent=1 // pred_fallthru
      _
    %v35 = vld [vmem:[#allocation3] sm:$0xff]
    %v36 = vld [vmem:[%s1] sm:$0x1]
    %v37 = vld [vmem:[%s3] sm:$0xff]
    %v39 = vperm.slane %v36, 0
    %v41 = vmul.f32 %v35, %v39
    %vm42 = vcmask 261120
    %v43 = vsel %vm42, %v41, 0.0
    %44 = vadd.xlane.f32.xlu0 %v43
    %v45 = vpop.xlane.xlu0 %44
    %v46 = vadd.f32 %v37, %v45
    %vm47 = vcmask 7168
    %48 = vst.msk [vmem:[%s3] sm:$0xff] %vm47, %v46
    // Predicated region
    $region22: #{tpu_custom_call.1} parent=1 // pred_check
      %p49 = pneg %p29
    $region23: #{tpu_custom_call.1} parent=1 // pred_check_branch
      %51 = sbr.rel (%p49) target = $region25
    $region24: #{tpu_custom_call.1} parent=1 // pred_region
      %v52 = vld [vmem:[%s3] sm:$0xff]
      %s53 = sld [smem:[#allocation2]]
      %v54 = vstv %s53
      %v55 = vadd.f32 %v52, %v54
      %v56 = vsub.f32 0.0, %v55
      %v57 = vmul.f32 %v56, 1.442695
      %v58 = vpow.pop %v57
      %v59 = vadd.f32 %v58, 1.0
      %v60 = vrcp.pop %v59
      %v61 = vmul.f32 %v59, %v60
      %v62 = vsub.f32 1.0, %v61
      %v63 = vmul.f32 %v60, %v62
      %v64 = vadd.f32 %v60, %v63
      %vm65 = vweird.f32 %v59
      %vm66 = vweird.f32 %v60
      %vm67 = vmor %vm65, %vm66
      %v68 = vsel %vm67, %v60, %v64
      %v69 = vand.u32 2147483647, %v59
      %vm70 = vcmp.eq.f32.partialorder %v69, 8.507059e+37
      %v71 = vand.u32 %v59, 2147483648
      %v72 = vor.u32 1.1754944e-38, %v71
      %v73 = vsel %vm70, %v72, %v68
      %v74 = vmul.f32 1.0, %v73
      %75 = vst.msk [vmem:[%s3] sm:$0xff] %vm47, %v74
    $region25: #{tpu_custom_call.1} parent=1 // pred_fallthru
      _
    // Predicated region
    $region26: #{tpu_custom_call.1} parent=1 // pred_check
      _
    $region27: #{tpu_custom_call.1} parent=1 // pred_check_branch
      %77 = sbr.rel (0) target = $region29
    $region28: #{tpu_custom_call.1} parent=1 // pred_region
      _
    $region29: #{tpu_custom_call.1} parent=1 // pred_fallthru
      _
    // Predicated region
    $region30: #{tpu_custom_call.1} parent=1 // pred_check
      _
    $region31: #{tpu_custom_call.1} parent=1 // pred_check_branch
      %79 = sbr.rel (0) target = $region33
    $region32: #{tpu_custom_call.1} parent=1 // pred_region
      _
    $region33: #{tpu_custom_call.1} parent=1 // pred_fallthru
      _
    %80 = vsyncpa [#allocation4], 1

</llo_original>
